<compile_context>
chip_gen: v7x
topology: tpu7x:2x2x1
jax: 0.10.0
libtpu: 0.0.40
codegen_flags: <defaults>
</compile_context>

<pallas_src>
import numpy as np
import jax
import jax.numpy as jnp
from jax.experimental import pallas as pl
from jax.experimental.pallas import tpu as pltpu

LANES = 128
TARGET_BLOCK_BYTES = 2 * 1024 * 1024   # ~2 MiB per buffer; x4 (dbl-buffered in+out) = ~8 MiB VMEM


def _sublane_granule(dtype):
    # Min sublane tile per dtype packing: f32 -> 8, bf16/f16 -> 16, 1-byte -> 32.
    itemsize = jnp.dtype(dtype).itemsize
    return max(8, 8 * (4 // itemsize))


def swish_kernel(x_ref, o_ref):
    # Load native dtype, do the math in f32 (cast is hidden under DMA), store
    # back in native dtype.  sigmoid -> EUP, multiply -> VPU.
    x = x_ref[...].astype(jnp.float32)
    o_ref[...] = (x * jax.nn.sigmoid(x)).astype(o_ref.dtype)


def swish(x):
    """x * sigmoid(x) for any shape / float dtype via a lane-dense Pallas kernel."""
    orig_shape = x.shape
    dtype = x.dtype
    n = int(np.prod(orig_shape))
    itemsize = jnp.dtype(dtype).itemsize
    granule = _sublane_granule(dtype)

    # Lane-dense layout: flatten to a (rows, 128) slab.  Only the sub-128 tail
    # is padded (and only when numel % 128 != 0); no rounding to tile size.
    xf = jnp.ravel(x)
    pad = (-n) % LANES
    if pad:
        xf = jnp.pad(xf, (0, pad))
    rows = (n + pad) // LANES
    x2d = xf.reshape(rows, LANES)

    # Block sizing: ~2 MiB per buffer, rows rounded down to the sublane granule.
    max_tile_rows = max(
        granule,
        (TARGET_BLOCK_BYTES // (LANES * itemsize)) // granule * granule,
    )
    if rows <= max_tile_rows:
        tile_rows = rows            # single full-extent block (small inputs)
    else:
        tile_rows = max_tile_rows   # multi-MiB blocks; ragged last block OK
    grid = (pl.cdiv(rows, tile_rows),)

    out2d = pl.pallas_call(
        swish_kernel,
        out_shape=jax.ShapeDtypeStruct((rows, LANES), dtype),
        grid=grid,
        in_specs=[pl.BlockSpec((tile_rows, LANES), lambda i: (i, 0))],
        out_specs=pl.BlockSpec((tile_rows, LANES), lambda i: (i, 0)),
        compiler_params=pltpu.CompilerParams(
            dimension_semantics=("parallel",)),
        cost_estimate=pl.CostEstimate(
            flops=5 * n,
            transcendentals=n,
            bytes_accessed=2 * n * itemsize),
    )(x2d)

    out = jnp.ravel(out2d)
    if pad:
        out = out[:n]
    return out.reshape(orig_shape)


swish_jit = jax.jit(swish)


if __name__ == "__main__":
    key = jax.random.PRNGKey(0)
    x = jax.random.normal(key, (2, 4, 16, 16), jnp.float32)

    out = jax.block_until_ready(swish_jit(x))

    ref = jax.block_until_ready(x * jax.nn.sigmoid(x))
    assert out.shape == x.shape and out.dtype == x.dtype
    np.testing.assert_allclose(np.asarray(out), np.asarray(ref),
                               rtol=1e-5, atol=1e-5)
    print("KERNEL_OK")
</pallas_src>

<mosaic_0001>
module attributes {stable_mosaic.version = 11 : i64} {
  func.func @swish_kernel(%arg0: i32, %arg1: memref<16x128xf32, #tpu.memory_space<vmem>>, %arg2: memref<16x128xf32, #tpu.memory_space<vmem>>) attributes {dimension_semantics = [#tpu.dimension_semantics<parallel>], iteration_bounds = array<i64: 1>, scalar_prefetch = 0 : i64, scratch_operands = 0 : i64, tpu.core_type = #tpu.core_type<tc>, window_params = [{transform_indices = @transform_0, window_bounds = array<i64: 16, 128>}, {transform_indices = @transform_1, window_bounds = array<i64: 16, 128>}]} {
    %c0 = arith.constant 0 : index
    %c0_0 = arith.constant 0 : index
    %0 = vector.load %arg1[%c0, %c0_0] : memref<16x128xf32, #tpu.memory_space<vmem>>, vector<16x128xf32>
    %1 = arith.negf %0 : vector<16x128xf32>
    %2 = math.exp %1 : vector<16x128xf32>
    %cst = arith.constant 1.000000e+00 : f32
    %3 = vector.broadcast %cst : f32 to vector<16x128xf32>
    %4 = arith.addf %3, %2 : vector<16x128xf32>
    %5 = arith.divf %3, %4 : vector<16x128xf32>
    %6 = arith.mulf %0, %5 : vector<16x128xf32>
    %c0_1 = arith.constant 0 : index
    %c0_2 = arith.constant 0 : index
    %7 = vector.load %arg2[%c0_1, %c0_2] : memref<16x128xf32, #tpu.memory_space<vmem>>, vector<16x128xf32>
    tpu.vector_store %arg2[%c0_1, %c0_2], %6 {strides = array<i32>} : memref<16x128xf32, #tpu.memory_space<vmem>>, vector<16x128xf32>,
    return
  }
  func.func @transform_0(%arg0: i32) -> (i32, i32) {
    %c0_i32 = arith.constant 0 : i32
    %c0_i32_0 = arith.constant 0 : i32
    return %arg0, %c0_i32 : i32, i32
  }
  func.func @transform_1(%arg0: i32) -> (i32, i32) {
    %c0_i32 = arith.constant 0 : i32
    %c0_i32_0 = arith.constant 0 : i32
    return %arg0, %c0_i32 : i32, i32
  }
}

</mosaic_0001>

<llo_original>
// kernel: swish.1
$region0: #{swish.1}
  #allocation0 [shape = 'u32[]', space=smem, size = 0x4, offset = 0x4, fixed_abs, tag = 'smem constant byte address 0x4 - core index']
  #allocation1 [shape = 'u32[144,128]{1,0:T(1,128)}', space=vmem, size = 0x12000, scoped, tag = 'internal scratch']
  %s0 = inlined_call_operand.vmem [shape: f32[16,128], index: 0, kind: input, shape index: {}]
  %s1 = inlined_call_operand.vmem [shape: f32[16,128], index: 1, kind: output, shape index: {}]
  %s2 = sld [smem:[#allocation0]]
  $region14: #{swish.1} parent=0
    _
  %s4 = ssub.s32 1, %s2
  %s5 = scalar_select 0, %s4, %s2
  // Predicated region
  $region2: #{swish.1} parent=0 // pred_check
    _
  $region3: #{swish.1} parent=0 // pred_check_branch
    %7 = sbr.rel (0) target = $region5
  $region4: #{swish.1} parent=0 // pred_region
    _
  $region5: #{swish.1} parent=0 // pred_fallthru
    _
  %v8 = vld [vmem:[%s0] sm:$0xff]
  %v9 = vld [vmem:[%s0 + $0x8] sm:$0xff]
  %v10 = vxor.u32 %v8, 2147483648
  %v11 = vxor.u32 %v9, 2147483648
  %v12 = vmul.f32 %v10, 1.442695
  %v13 = vpow.pop %v12
  %v14 = vmul.f32 %v11, 1.442695
  %v15 = vpow.pop %v14
  %v16 = vadd.f32 %v13, 1.0
  %v17 = vadd.f32 %v15, 1.0
  %v18 = vrcp.pop %v16
  %v19 = vmul.f32 1.0, %v18
  %v20 = vrcp.pop %v17
  %v21 = vmul.f32 1.0, %v20
  %v22 = vmul.f32 %v8, %v19
  %v23 = vmul.f32 %v9, %v21
  %24 = vst [vmem:[%s1] sm:$0xff] %v22
  %25 = vst [vmem:[%s1 + $0x8] sm:$0xff] %v23
  // Predicated region
  $region6: #{swish.1} parent=0 // pred_check
    _
  $region7: #{swish.1} parent=0 // pred_check_branch
    %27 = sbr.rel (0) target = $region9
  $region8: #{swish.1} parent=0 // pred_region
    _
  $region9: #{swish.1} parent=0 // pred_fallthru
    _
  // Predicated region
  $region10: #{swish.1} parent=0 // pred_check
    _
  $region11: #{swish.1} parent=0 // pred_check_branch
    %29 = sbr.rel (0) target = $region13
  $region12: #{swish.1} parent=0 // pred_region
    _
  $region13: #{swish.1} parent=0 // pred_fallthru
    _

</llo_original>
